<compile_context>
chip_gen: v7x
topology: tpu7x:2x2x1
jax: 0.10.0
libtpu: 0.0.40
codegen_flags: <defaults>
</compile_context>

<pallas_src>
import functools

import numpy as np

import jax
import jax.numpy as jnp
from jax.experimental import pallas as pl
from jax.experimental.pallas import tpu as pltpu


def _round_up(x, m):
  return (x + m - 1) // m * m


def _sigmoid(x, *, approx):
  e = jnp.exp(-x)                       # EUP
  if approx:
    # Approx reciprocal also stays on the EUP slot (frees the VALU).
    return pl.reciprocal(1.0 + e, approx=True)
  return 1.0 / (1.0 + e)                # exact path for f32-strict mode


def _lgma_kernel(scalars_ref, xg_ref, xl_ref, w_ref, b_ref, out_ref, *,
                 matmul_dtype, approx_sigmoid):
  """One batch tile: gate, mix, project.

  scalars_ref : SMEM f32[2]        -> [mu, lam]
  xg_ref      : VMEM (TB, Cp)      x_global tile
  xl_ref      : VMEM (TB, Cp)      x_local tile
  w_ref       : VMEM (Cp, Cp)      fc weight, pre-transposed (y = x @ w)
  b_ref       : VMEM (1, Cp)       fc bias (f32)
  out_ref     : VMEM (TB, Cp)
  """
  mu = scalars_ref[0]
  lam = scalars_ref[1]

  xg = xg_ref[...].astype(jnp.float32)
  xl = xl_ref[...].astype(jnp.float32)

  v1 = mu * _sigmoid(xg, approx=approx_sigmoid)    # mu  * sigmoid(x_global)
  v2 = lam * _sigmoid(xl, approx=approx_sigmoid)   # lam * sigmoid(x_local)
  pre = xl * v1 + xg * v2                          # x_local_att + x_global_att

  acc = jnp.dot(pre.astype(matmul_dtype), w_ref[...],
                preferred_element_type=jnp.float32)
  out_ref[...] = (acc + b_ref[...]).astype(out_ref.dtype)


def lgma(x_global, x_local, mu, lam, fc_weight, fc_bias, *,
         block_b=512, matmul_dtype=jnp.bfloat16):
  """Pallas LGMA forward.

  x_global, x_local : (B, C) float32 (bf16 inputs also accepted; gating math
                      is always done in f32 inside the kernel)
  mu, lam           : scalar parameters (shape () or (1,))
  fc_weight         : (C, C) PyTorch-layout Linear weight (y = x @ W^T + b)
  fc_bias           : (C,)
  matmul_dtype      : dtype of the MXU operands (bf16 default, f32 for exact)
  """
  B, C = x_global.shape
  assert x_local.shape == (B, C)
  assert fc_weight.shape == (C, C)
  assert fc_bias.shape == (C,)

  out_dtype = x_global.dtype
  exact = (jnp.dtype(matmul_dtype) == jnp.dtype(jnp.float32))

  # ---- lane-dense feature dim -------------------------------------------
  C_pad = _round_up(C, 128)

  # ---- batch tile selection ----------------------------------------------
  block_b = max(8, min(int(block_b), _round_up(B, 8)))
  block_b = _round_up(block_b, 8)

  in_isz = jnp.dtype(x_global.dtype).itemsize
  out_isz = jnp.dtype(out_dtype).itemsize
  w_isz = jnp.dtype(matmul_dtype).itemsize

  def footprint(bb):
    # double-buffered xg/xl/out tiles + resident weight + bias
    io = 2 * bb * C_pad * (2 * in_isz + out_isz)
    return io + C_pad * C_pad * w_isz + C_pad * 4

  VMEM_BUDGET = 48 << 20   # leaves headroom on v7x's 64 MiB physical VMEM
  while footprint(block_b) > VMEM_BUDGET and block_b > 8:
    block_b = max(8, block_b // 2)
  # TODO(synk): for very large in_channels (C_pad >= ~4K) the resident weight
  # alone exceeds the budget; tile N (and K with an f32 accumulator) instead.

  B_pad = _round_up(B, block_b)

  # ---- host-side parameter prep (constant-folds under jit) ----------------
  scalars = jnp.concatenate(
      [jnp.reshape(mu, (1,)), jnp.reshape(lam, (1,))]).astype(jnp.float32)
  # Note: ideally store the weight pre-transposed as a parameter so this
  # transpose (an extra HBM pass at large C) disappears from the hot path.
  w_t = fc_weight.T.astype(matmul_dtype)
  b2 = fc_bias.reshape(1, C).astype(jnp.float32)

  xg, xl = x_global, x_local
  if C_pad != C:
    pc = C_pad - C
    xg = jnp.pad(xg, ((0, 0), (0, pc)))
    xl = jnp.pad(xl, ((0, 0), (0, pc)))
    w_t = jnp.pad(w_t, ((0, pc), (0, pc)))
    b2 = jnp.pad(b2, ((0, 0), (0, pc)))
  if B_pad != B:
    pb = B_pad - B
    xg = jnp.pad(xg, ((0, pb), (0, 0)))
    xl = jnp.pad(xl, ((0, pb), (0, 0)))

  vmem_limit = None
  need = footprint(block_b)
  if need > (28 << 20):
    vmem_limit = int(min(need + (4 << 20), 60 << 20))

  grid = (B_pad // block_b,)
  kernel = functools.partial(_lgma_kernel,
                             matmul_dtype=matmul_dtype,
                             approx_sigmoid=not exact)

  out = pl.pallas_call(
      kernel,
      grid=grid,
      in_specs=[
          pl.BlockSpec(memory_space=pltpu.MemorySpace.SMEM),       # mu/lam
          pl.BlockSpec((block_b, C_pad), lambda i: (i, 0)),        # x_global
          pl.BlockSpec((block_b, C_pad), lambda i: (i, 0)),        # x_local
          pl.BlockSpec((C_pad, C_pad), lambda i: (0, 0)),          # weight
          pl.BlockSpec((1, C_pad), lambda i: (0, 0)),              # bias
      ],
      out_specs=pl.BlockSpec((block_b, C_pad), lambda i: (i, 0)),
      out_shape=jax.ShapeDtypeStruct((B_pad, C_pad), out_dtype),
      compiler_params=pltpu.CompilerParams(
          dimension_semantics=("parallel",),
          vmem_limit_bytes=vmem_limit),
  )(scalars, xg, xl, w_t, b2)

  if B_pad != B or C_pad != C:
    out = out[:B, :C]
  return out


def reference(x_global, x_local, mu, lam, fc_weight, fc_bias):
  """Pure-JAX replica of LGMA.forward (PyTorch semantics)."""
  v1 = mu * jax.nn.sigmoid(x_global)
  v2 = lam * jax.nn.sigmoid(x_local)
  x_local_att = x_local * v1
  x_global_att = x_global * v2
  pre = x_local_att + x_global_att
  return pre @ fc_weight.T + fc_bias


if __name__ == "__main__":
  batch = 50          # ragged batch -> padded to the 8-row sublane grain
  in_channels = 96    # not a multiple of 128 -> padded to a lane-dense 128

  key = jax.random.PRNGKey(0)
  k_xg, k_xl, k_w, k_b = jax.random.split(key, 4)

  x_global = jax.random.normal(k_xg, (batch, in_channels), jnp.float32)
  x_local = jax.random.normal(k_xl, (batch, in_channels), jnp.float32)

  # mu / lam init to 1.0 in the module; perturb so both scalars are exercised.
  mu = jnp.float32(1.3)
  lam = jnp.float32(0.7)
  w_scale = 1.0 / np.sqrt(in_channels)
  fc_weight = jax.random.normal(
      k_w, (in_channels, in_channels), jnp.float32) * w_scale
  fc_bias = jax.random.normal(k_b, (in_channels,), jnp.float32) * 0.1

  ref = reference(x_global, x_local, mu, lam, fc_weight, fc_bias)

  # Exact path (f32 MXU operands, exact sigmoid) -- matches PyTorch closely.
  out_f32 = jax.block_until_ready(
      lgma(x_global, x_local, mu, lam, fc_weight, fc_bias,
           matmul_dtype=jnp.float32))
  np.testing.assert_allclose(np.asarray(out_f32), np.asarray(ref),
                             rtol=1e-5, atol=1e-5)

  # Default fast path (bf16 MXU operands, f32 accumulation, approx recip).
  out_fast = jax.block_until_ready(
      lgma(x_global, x_local, mu, lam, fc_weight, fc_bias))
  np.testing.assert_allclose(np.asarray(out_fast), np.asarray(ref),
                             rtol=3e-2, atol=3e-2)

  print("KERNEL_OK")
</pallas_src>

<mosaic_0001>
module attributes {stable_mosaic.version = 11 : i64} {
  func.func @_lgma_kernel(%arg0: i32, %arg1: memref<2xf32, #tpu.memory_space<smem>>, %arg2: memref<56x128xf32, #tpu.memory_space<vmem>>, %arg3: memref<56x128xf32, #tpu.memory_space<vmem>>, %arg4: memref<128x128xf32, #tpu.memory_space<vmem>>, %arg5: memref<1x128xf32, #tpu.memory_space<vmem>>, %arg6: memref<56x128xf32, #tpu.memory_space<vmem>>) attributes {dimension_semantics = [#tpu.dimension_semantics<parallel>], iteration_bounds = array<i64: 1>, scalar_prefetch = 0 : i64, scratch_operands = 0 : i64, tpu.core_type = #tpu.core_type<tc>, window_params = [{transform_indices = @transform_0, window_bounds = array<i64: 2>}, {transform_indices = @transform_1, window_bounds = array<i64: 56, 128>}, {transform_indices = @transform_2, window_bounds = array<i64: 56, 128>}, {pipeline_mode = #tpu.pipeline_mode<synchronous>, transform_indices = @transform_3, window_bounds = array<i64: 128, 128>}, {pipeline_mode = #tpu.pipeline_mode<synchronous>, transform_indices = @transform_4, window_bounds = array<i64: 1, 128>}, {transform_indices = @transform_5, window_bounds = array<i64: 56, 128>}]} {
    %c0 = arith.constant 0 : index
    %0 = memref.load %arg1[%c0] : memref<2xf32, #tpu.memory_space<smem>>
    %c1 = arith.constant 1 : index
    %1 = memref.load %arg1[%c1] : memref<2xf32, #tpu.memory_space<smem>>
    %c0_0 = arith.constant 0 : index
    %c0_1 = arith.constant 0 : index
    %2 = vector.load %arg2[%c0_0, %c0_1] : memref<56x128xf32, #tpu.memory_space<vmem>>, vector<56x128xf32>
    %c0_2 = arith.constant 0 : index
    %c0_3 = arith.constant 0 : index
    %3 = vector.load %arg3[%c0_2, %c0_3] : memref<56x128xf32, #tpu.memory_space<vmem>>, vector<56x128xf32>
    %cst = arith.constant 0.000000e+00 : f32
    %4 = vector.broadcast %cst : f32 to vector<56x128xf32>
    %5 = arith.subf %4, %2 : vector<56x128xf32>
    %6 = math.exp %5 : vector<56x128xf32>
    %cst_4 = arith.constant 1.000000e+00 : f32
    %7 = vector.broadcast %cst_4 : f32 to vector<56x128xf32>
    %8 = arith.addf %7, %6 : vector<56x128xf32>
    %cst_5 = arith.constant 1.000000e+00 : f32
    %9 = vector.broadcast %cst_5 : f32 to vector<56x128xf32>
    %10 = arith.divf %9, %8 : vector<56x128xf32>
    %11 = vector.broadcast %0 : f32 to vector<56x128xf32>
    %12 = arith.mulf %11, %10 : vector<56x128xf32>
    %cst_6 = arith.constant 0.000000e+00 : f32
    %13 = vector.broadcast %cst_6 : f32 to vector<56x128xf32>
    %14 = arith.subf %13, %3 : vector<56x128xf32>
    %15 = math.exp %14 : vector<56x128xf32>
    %cst_7 = arith.constant 1.000000e+00 : f32
    %16 = vector.broadcast %cst_7 : f32 to vector<56x128xf32>
    %17 = arith.addf %16, %15 : vector<56x128xf32>
    %cst_8 = arith.constant 1.000000e+00 : f32
    %18 = vector.broadcast %cst_8 : f32 to vector<56x128xf32>
    %19 = arith.divf %18, %17 : vector<56x128xf32>
    %20 = vector.broadcast %1 : f32 to vector<56x128xf32>
    %21 = arith.mulf %20, %19 : vector<56x128xf32>
    %22 = arith.mulf %3, %12 : vector<56x128xf32>
    %23 = arith.mulf %2, %21 : vector<56x128xf32>
    %24 = arith.addf %22, %23 : vector<56x128xf32>
    %c0_9 = arith.constant 0 : index
    %c0_10 = arith.constant 0 : index
    %25 = vector.load %arg4[%c0_9, %c0_10] : memref<128x128xf32, #tpu.memory_space<vmem>>, vector<128x128xf32>
    %cst_11 = arith.constant dense<0.000000e+00> : vector<56x128xf32>
    %26 = tpu.matmul %24, %25, %cst_11 {dimension_numbers = #tpu.dot_dimension_numbers<[1], [0], [0], [1], [0, 0, 1, 1], [], []>} : vector<56x128xf32>, vector<128x128xf32>, vector<56x128xf32> -> vector<56x128xf32>
    %c0_12 = arith.constant 0 : index
    %c0_13 = arith.constant 0 : index
    %27 = vector.load %arg5[%c0_12, %c0_13] : memref<1x128xf32, #tpu.memory_space<vmem>>, vector<1x128xf32>
    %28 = vector.broadcast %27 : vector<1x128xf32> to vector<56x128xf32>
    %29 = arith.addf %26, %28 : vector<56x128xf32>
    %c0_14 = arith.constant 0 : index
    %c0_15 = arith.constant 0 : index
    %30 = vector.load %arg6[%c0_14, %c0_15] : memref<56x128xf32, #tpu.memory_space<vmem>>, vector<56x128xf32>
    tpu.vector_store %arg6[%c0_14, %c0_15], %29 {strides = array<i32>} : memref<56x128xf32, #tpu.memory_space<vmem>>, vector<56x128xf32>,
    return
  }
  func.func @transform_0(%arg0: i32) -> i32 {
    %c0_i32 = arith.constant 0 : i32
    %c0_i32_0 = arith.constant 0 : i32
    return %c0_i32 : i32
  }
  func.func @transform_1(%arg0: i32) -> (i32, i32) {
    %c0_i32 = arith.constant 0 : i32
    %c0_i32_0 = arith.constant 0 : i32
    return %arg0, %c0_i32 : i32, i32
  }
  func.func @transform_2(%arg0: i32) -> (i32, i32) {
    %c0_i32 = arith.constant 0 : i32
    %c0_i32_0 = arith.constant 0 : i32
    return %arg0, %c0_i32 : i32, i32
  }
  func.func @transform_3(%arg0: i32) -> (i32, i32) {
    %c0_i32 = arith.constant 0 : i32
    %c0_i32_0 = arith.constant 0 : i32
    %c0_i32_1 = arith.constant 0 : i32
    return %c0_i32, %c0_i32_0 : i32, i32
  }
  func.func @transform_4(%arg0: i32) -> (i32, i32) {
    %c0_i32 = arith.constant 0 : i32
    %c0_i32_0 = arith.constant 0 : i32
    %c0_i32_1 = arith.constant 0 : i32
    return %c0_i32, %c0_i32_0 : i32, i32
  }
  func.func @transform_5(%arg0: i32) -> (i32, i32) {
    %c0_i32 = arith.constant 0 : i32
    %c0_i32_0 = arith.constant 0 : i32
    return %arg0, %c0_i32 : i32, i32
  }
}

</mosaic_0001>

<llo_original>
// kernel: tpu_custom_call.1
$region0: #{tpu_custom_call.1}
  #allocation0 [shape = 'u32[]', space=smem, size = 0x4, offset = 0x4, fixed_abs, tag = 'smem constant byte address 0x4 - core index']
  #allocation1 [shape = 'u32[144,128]{1,0:T(1,128)}', space=vmem, size = 0x12000, scoped, tag = 'internal scratch']
  %s0 = inlined_call_operand.hbm [shape: f32[2], index: 0, kind: input, shape index: {}]
  %s1 = inlined_call_operand.hbm [shape: f32[56,128], index: 1, kind: input, shape index: {}]
  %s2 = inlined_call_operand.hbm [shape: f32[56,128], index: 2, kind: input, shape index: {}]
  %s3 = inlined_call_operand.hbm [shape: f32[128,128], index: 3, kind: input, shape index: {}]
  %s4 = inlined_call_operand.vmem [shape: f32[1,128], index: 4, kind: input, shape index: {}]
  %s5 = inlined_call_operand.hbm [shape: f32[56,128], index: 5, kind: output, shape index: {}]
  %s6 = sld [smem:[#allocation0]]
  $region46: #{tpu_custom_call.1} parent=0
    _
  %s8 = ssub.s32 1, %s6
  %s9 = scalar_select 0, %s8, %s6
  $region1: #{tpu_custom_call.1} parent=0
    #allocation2 [shape = 'u8[512]{0}', space=smem, size = 0x200, scoped, tag = 'input window, operand 0, single buffered']
    #allocation3 [shape = 's32[1]{0}', space=sflag, size = 0x4, scoped, tag = 'scoped memory for tpu_custom_call.1']
    #allocation4 [shape = 's32[1]{0}', space=sflag, size = 0x4, scoped, tag = 'scoped memory for tpu_custom_call.1']
    #allocation5 [shape = 's32[1]{0}', space=sflag, size = 0x4, scoped, tag = 'scoped memory for tpu_custom_call.1']
    #allocation6 [shape = 'u8[28672]{0}', space=vmem, size = 0x7000, scoped, tag = 'input window, operand 1, single buffered']
    #allocation7 [shape = 'u8[28672]{0}', space=vmem, size = 0x7000, scoped, tag = 'input window, operand 2, single buffered']
    #allocation8 [shape = 's32[1]{0}', space=sflag, size = 0x4, scoped, tag = 'scoped memory for tpu_custom_call.1']
    #allocation9 [shape = 'u8[65536]{0}', space=vmem, size = 0x10000, scoped, tag = 'input window, operand 3, single buffered']
    #allocation10 [shape = 'u8[28672]{0}', space=vmem, size = 0x7000, scoped, tag = 'output window, operand 0, single buffered']
    %10 = vsyncpa [#allocation5], 0
    %11 = vsyncpa [#allocation3], 0
    %12 = vsyncpa [#allocation8], 0
    %13 = vsyncpa [#allocation4], 0
    // Predicated region
    $region2: #{tpu_custom_call.1} parent=1 // pred_check
      _
    $region3: #{tpu_custom_call.1} parent=1 // pred_check_branch
      %15 = sbr.rel (0) target = $region5
    $region4: #{tpu_custom_call.1} parent=1 // pred_region
      %s17 = ssub.s32 16, 16
      %18 = vsyncadd [#allocation5], %s17
      %21 = dma.hbm_to_smem %s0, 16, [#allocation2], [#allocation5]
    $region5: #{tpu_custom_call.1} parent=1 // pred_fallthru
      _
    // Predicated region
    $region6: #{tpu_custom_call.1} parent=1 // pred_check
      _
    $region7: #{tpu_custom_call.1} parent=1 // pred_check_branch
      %23 = sbr.rel (0) target = $region9
    $region8: #{tpu_custom_call.1} parent=1 // pred_region
      %s25 = ssub.s32 896, 896
      %26 = vsyncadd [#allocation3], %s25
      %s27 = sshll.u32 [#allocation6], 4
      %s28 = int_to_ptr.vmem [resolvable:$true] %s27
      %33 = dma.hbm_to_vmem [thread:$0]  %s1, 896, %s28, [#allocation3], 128, 128, 8
    $region9: #{tpu_custom_call.1} parent=1 // pred_fallthru
      _
    // Predicated region
    $region10: #{tpu_custom_call.1} parent=1 // pred_check
      _
    $region11: #{tpu_custom_call.1} parent=1 // pred_check_branch
      %35 = sbr.rel (0) target = $region13
    $region12: #{tpu_custom_call.1} parent=1 // pred_region
      %s37 = ssub.s32 896, 896
      %38 = vsyncadd [#allocation8], %s37
      %s39 = sshll.u32 [#allocation7], 4
      %s40 = int_to_ptr.vmem [resolvable:$true] %s39
      %45 = dma.hbm_to_vmem [thread:$0]  %s2, 896, %s40, [#allocation8], 128, 128, 8
    $region13: #{tpu_custom_call.1} parent=1 // pred_fallthru
      _
    // Predicated region
    $region14: #{tpu_custom_call.1} parent=1 // pred_check
      _
    $region15: #{tpu_custom_call.1} parent=1 // pred_check_branch
      %47 = sbr.rel (0) target = $region17
    $region16: #{tpu_custom_call.1} parent=1 // pred_region
      %s49 = ssub.s32 2048, 2048
      %50 = vsyncadd [#allocation8], %s49
      %s51 = sshll.u32 [#allocation9], 4
      %s52 = int_to_ptr.vmem [resolvable:$true] %s51
      %57 = dma.hbm_to_vmem [thread:$0]  %s3, 2048, %s52, [#allocation8], 128, 128, 8
    $region17: #{tpu_custom_call.1} parent=1 // pred_fallthru
      _
    // Predicated region
    $region18: #{tpu_custom_call.1} parent=1 // pred_check
      _
    $region19: #{tpu_custom_call.1} parent=1 // pred_check_branch
      %59 = sbr.rel (0) target = $region21
    $region20: #{tpu_custom_call.1} parent=1 // pred_region
      _
    $region21: #{tpu_custom_call.1} parent=1 // pred_fallthru
      _
    // Predicated region
    $region22: #{tpu_custom_call.1} parent=1 // pred_check
      _
    $region23: #{tpu_custom_call.1} parent=1 // pred_check_branch
      %61 = sbr.rel (0) target = $region25
    $region24: #{tpu_custom_call.1} parent=1 // pred_region
      %62 = dma.done [#allocation5], 16
    $region25: #{tpu_custom_call.1} parent=1 // pred_fallthru
      _
    // Predicated region
    $region26: #{tpu_custom_call.1} parent=1 // pred_check
      _
    $region27: #{tpu_custom_call.1} parent=1 // pred_check_branch
      %64 = sbr.rel (0) target = $region29
    $region28: #{tpu_custom_call.1} parent=1 // pred_region
      %65 = dma.done [#allocation3], 896
    $region29: #{tpu_custom_call.1} parent=1 // pred_fallthru
      _
    // Predicated region
    $region30: #{tpu_custom_call.1} parent=1 // pred_check
      _
    $region31: #{tpu_custom_call.1} parent=1 // pred_check_branch
      %67 = sbr.rel (0) target = $region33
    $region32: #{tpu_custom_call.1} parent=1 // pred_region
      %68 = dma.done [#allocation8], 896
    $region33: #{tpu_custom_call.1} parent=1 // pred_fallthru
      _
    // Predicated region
    $region34: #{tpu_custom_call.1} parent=1 // pred_check
      _
    $region35: #{tpu_custom_call.1} parent=1 // pred_check_branch
      %70 = sbr.rel (0) target = $region37
    $region36: #{tpu_custom_call.1} parent=1 // pred_region
      %71 = dma.done [#allocation8], 2048
    $region37: #{tpu_custom_call.1} parent=1 // pred_fallthru
      _
    %72 = sfence
    %s73 = sld [smem:[#allocation2]]
    %s74 = sld [smem:[#allocation2 + $0x1]]
    %v75 = vld [vmem:[#allocation6] sm:$0xff]
    %v76 = vld [vmem:[#allocation6 + $0x8] sm:$0xff]
    %v77 = vld [vmem:[#allocation6 + $0x10] sm:$0xff]
    %v78 = vld [vmem:[#allocation6 + $0x18] sm:$0xff]
    %v79 = vld [vmem:[#allocation6 + $0x20] sm:$0xff]
    %v80 = vld [vmem:[#allocation6 + $0x28] sm:$0xff]
    %v81 = vld [vmem:[#allocation6 + $0x30] sm:$0xff]
    %v82 = vld [vmem:[#allocation7] sm:$0xff]
    %v83 = vld [vmem:[#allocation7 + $0x8] sm:$0xff]
    %v84 = vld [vmem:[#allocation7 + $0x10] sm:$0xff]
    %v85 = vld [vmem:[#allocation7 + $0x18] sm:$0xff]
    %v86 = vld [vmem:[#allocation7 + $0x20] sm:$0xff]
    %v87 = vld [vmem:[#allocation7 + $0x28] sm:$0xff]
    %v88 = vld [vmem:[#allocation7 + $0x30] sm:$0xff]
    %v89 = vsub.f32 0.0, %v75
    %v90 = vsub.f32 0.0, %v76
    %v91 = vsub.f32 0.0, %v77
    %v92 = vsub.f32 0.0, %v78
    %v93 = vsub.f32 0.0, %v79
    %v94 = vsub.f32 0.0, %v80
    %v95 = vsub.f32 0.0, %v81
    %v96 = vmul.f32 %v89, 1.442695
    %v97 = vpow.pop %v96
    %v98 = vmul.f32 %v90, 1.442695
    %v99 = vpow.pop %v98
    %v100 = vmul.f32 %v91, 1.442695
    %v101 = vpow.pop %v100
    %v102 = vmul.f32 %v92, 1.442695
    %v103 = vpow.pop %v102
    %v104 = vmul.f32 %v93, 1.442695
    %v105 = vpow.pop %v104
    %v106 = vmul.f32 %v94, 1.442695
    %v107 = vpow.pop %v106
    %v108 = vmul.f32 %v95, 1.442695
    %v109 = vpow.pop %v108
    %v110 = vadd.f32 %v97, 1.0
    %v111 = vadd.f32 %v99, 1.0
    %v112 = vadd.f32 %v101, 1.0
    %v113 = vadd.f32 %v103, 1.0
    %v114 = vadd.f32 %v105, 1.0
    %v115 = vadd.f32 %v107, 1.0
    %v116 = vadd.f32 %v109, 1.0
    %v117 = vrcp.pop %v110
    %v118 = vmul.f32 1.0, %v117
    %v119 = vrcp.pop %v111
    %v120 = vmul.f32 1.0, %v119
    %v121 = vrcp.pop %v112
    %v122 = vmul.f32 1.0, %v121
    %v123 = vrcp.pop %v113
    %v124 = vmul.f32 1.0, %v123
    %v125 = vrcp.pop %v114
    %v126 = vmul.f32 1.0, %v125
    %v127 = vrcp.pop %v115
    %v128 = vmul.f32 1.0, %v127
    %v129 = vrcp.pop %v116
    %v130 = vmul.f32 1.0, %v129
    %v131 = vstv %s73
    %v132 = vmul.f32 %v131, %v118
    %v133 = vmul.f32 %v131, %v120
    %v134 = vmul.f32 %v131, %v122
    %v135 = vmul.f32 %v131, %v124
    %v136 = vmul.f32 %v131, %v126
    %v137 = vmul.f32 %v131, %v128
    %v138 = vmul.f32 %v131, %v130
    %v139 = vsub.f32 0.0, %v82
    %v140 = vsub.f32 0.0, %v83
    %v141 = vsub.f32 0.0, %v84
    %v142 = vsub.f32 0.0, %v85
    %v143 = vsub.f32 0.0, %v86
    %v144 = vsub.f32 0.0, %v87
    %v145 = vsub.f32 0.0, %v88
    %v146 = vmul.f32 %v139, 1.442695
    %v147 = vpow.pop %v146
    %v148 = vmul.f32 %v140, 1.442695
    %v149 = vpow.pop %v148
    %v150 = vmul.f32 %v141, 1.442695
    %v151 = vpow.pop %v150
    %v152 = vmul.f32 %v142, 1.442695
    %v153 = vpow.pop %v152
    %v154 = vmul.f32 %v143, 1.442695
    %v155 = vpow.pop %v154
    %v156 = vmul.f32 %v144, 1.442695
    %v157 = vpow.pop %v156
    %v158 = vmul.f32 %v145, 1.442695
    %v159 = vpow.pop %v158
    %v160 = vadd.f32 %v147, 1.0
    %v161 = vadd.f32 %v149, 1.0
    %v162 = vadd.f32 %v151, 1.0
    %v163 = vadd.f32 %v153, 1.0
    %v164 = vadd.f32 %v155, 1.0
    %v165 = vadd.f32 %v157, 1.0
    %v166 = vadd.f32 %v159, 1.0
    %v167 = vrcp.pop %v160
    %v168 = vmul.f32 1.0, %v167
    %v169 = vrcp.pop %v161
    %v170 = vmul.f32 1.0, %v169
    %v171 = vrcp.pop %v162
    %v172 = vmul.f32 1.0, %v171
    %v173 = vrcp.pop %v163
    %v174 = vmul.f32 1.0, %v173
    %v175 = vrcp.pop %v164
    %v176 = vmul.f32 1.0, %v175
    %v177 = vrcp.pop %v165
    %v178 = vmul.f32 1.0, %v177
    %v179 = vrcp.pop %v166
    %v180 = vmul.f32 1.0, %v179
    %v181 = vstv %s74
    %v182 = vmul.f32 %v181, %v168
    %v183 = vmul.f32 %v181, %v170
    %v184 = vmul.f32 %v181, %v172
    %v185 = vmul.f32 %v181, %v174
    %v186 = vmul.f32 %v181, %v176
    %v187 = vmul.f32 %v181, %v178
    %v188 = vmul.f32 %v181, %v180
    %v189 = vmul.f32 %v82, %v132
    %v190 = vmul.f32 %v83, %v133
    %v191 = vmul.f32 %v84, %v134
    %v192 = vmul.f32 %v85, %v135
    %v193 = vmul.f32 %v86, %v136
    %v194 = vmul.f32 %v87, %v137
    %v195 = vmul.f32 %v88, %v138
    %v196 = vmul.f32 %v75, %v182
    %v197 = vmul.f32 %v76, %v183
    %v198 = vmul.f32 %v77, %v184
    %v199 = vmul.f32 %v78, %v185
    %v200 = vmul.f32 %v79, %v186
    %v201 = vmul.f32 %v80, %v187
    %v202 = vmul.f32 %v81, %v188
    %v203 = vadd.f32 %v189, %v196
    %v204 = vadd.f32 %v190, %v197
    %v205 = vadd.f32 %v191, %v198
    %v206 = vadd.f32 %v192, %v199
    %v207 = vadd.f32 %v193, %v200
    %v208 = vadd.f32 %v194, %v201
    %v209 = vadd.f32 %v195, %v202
    %v210 = vld [vmem:[#allocation9] sm:$0xff]
    %v211 = vld [vmem:[#allocation9 + $0x8] sm:$0xff]
    %v212 = vld [vmem:[#allocation9 + $0x10] sm:$0xff]
    %v213 = vld [vmem:[#allocation9 + $0x18] sm:$0xff]
    %v214 = vld [vmem:[#allocation9 + $0x20] sm:$0xff]
    %v215 = vld [vmem:[#allocation9 + $0x28] sm:$0xff]
    %v216 = vld [vmem:[#allocation9 + $0x30] sm:$0xff]
    %v217 = vld [vmem:[#allocation9 + $0x38] sm:$0xff]
    %v218 = vld [vmem:[#allocation9 + $0x40] sm:$0xff]
    %v219 = vld [vmem:[#allocation9 + $0x48] sm:$0xff]
    %v220 = vld [vmem:[#allocation9 + $0x50] sm:$0xff]
    %v221 = vld [vmem:[#allocation9 + $0x58] sm:$0xff]
    %v222 = vld [vmem:[#allocation9 + $0x60] sm:$0xff]
    %v223 = vld [vmem:[#allocation9 + $0x68] sm:$0xff]
    %v224 = vld [vmem:[#allocation9 + $0x70] sm:$0xff]
    %v225 = vld [vmem:[#allocation9 + $0x78] sm:$0xff]
    %v226 = vld [vmem:[%s4] sm:$0x1]
    %v228 = vlaneseq
    %v229 = vshrl.u32 %v228, 7
    %v230 = vsub.s32 0, %v229
    %v231 = vrot.slane %v226, %v230
    %233 = vmatprep.subr.mxu0 0.0
    %234 = vmatpush1.msra.mxu0 %v210
    %235 = vmatprep.subr.mxu0 0.0
    %236 = vmatpush1.msra.mxu0 %v211
    %237 = vmatprep.subr.mxu0 0.0
    %238 = vmatpush1.msra.mxu0 %v212
    %239 = vmatprep.subr.mxu0 0.0
    %240 = vmatpush1.msra.mxu0 %v213
    %241 = vmatprep.subr.mxu0 0.0
    %242 = vmatpush1.msra.mxu0 %v214
    %243 = vmatprep.subr.mxu0 0.0
    %244 = vmatpush1.msra.mxu0 %v215
    %245 = vmatprep.subr.mxu0 0.0
    %246 = vmatpush1.msra.mxu0 %v216
    %247 = vmatprep.subr.mxu0 0.0
    %248 = vmatpush1.msra.mxu0 %v217
    %249 = vmatprep.subr.mxu0 0.0
    %250 = vmatpush1.msra.mxu0 %v218
    %251 = vmatprep.subr.mxu0 0.0
    %252 = vmatpush1.msra.mxu0 %v219
    %253 = vmatprep.subr.mxu0 0.0
    %254 = vmatpush1.msra.mxu0 %v220
    %255 = vmatprep.subr.mxu0 0.0
    %256 = vmatpush1.msra.mxu0 %v221
    %257 = vmatprep.subr.mxu0 0.0
    %258 = vmatpush1.msra.mxu0 %v222
    %259 = vmatprep.subr.mxu0 0.0
    %260 = vmatpush1.msra.mxu0 %v223
    %261 = vmatprep.subr.mxu0 0.0
    %262 = vmatpush1.msra.mxu0 %v224
    %263 = vmatprep.subr.mxu0 0.0
    %264 = vmatpush1.msra.mxu0 %v225
    %265 = vmatprep.subr.mxu0 0.0
    %266 = vmatpush1.msra.mxu0 0.0
    %267 = vmatprep.subr.mxu0 0.0
    %268 = vmatpush1.msra.mxu0 0.0
    %269 = vmatprep.subr.mxu0 0.0
    %270 = vmatpush1.msra.mxu0 0.0
    %271 = vmatprep.subr.mxu0 0.0
    %272 = vmatpush1.msra.mxu0 0.0
    %273 = vmatprep.subr.mxu0 0.0
    %274 = vmatpush1.msra.mxu0 0.0
    %275 = vmatprep.subr.mxu0 0.0
    %276 = vmatpush1.msra.mxu0 0.0
    %277 = vmatprep.subr.mxu0 0.0
    %278 = vmatpush1.msra.mxu0 0.0
    %279 = vmatprep.subr.mxu0 0.0
    %280 = vmatpush1.msra.mxu0 0.0
    %281 = vmatprep.subr.mxu0 0.0
    %282 = vmatpush1.msra.mxu0 0.0
    %283 = vmatprep.subr.mxu0 0.0
    %284 = vmatpush1.msra.mxu0 0.0
    %285 = vmatprep.subr.mxu0 0.0
    %286 = vmatpush1.msra.mxu0 0.0
    %287 = vmatprep.subr.mxu0 0.0
    %288 = vmatpush1.msra.mxu0 0.0
    %289 = vmatprep.subr.mxu0 0.0
    %290 = vmatpush1.msra.mxu0 0.0
    %291 = vmatprep.subr.mxu0 0.0
    %292 = vmatpush1.msra.mxu0 0.0
    %293 = vmatprep.subr.mxu0 0.0
    %294 = vmatpush1.msra.mxu0 0.0
    %295 = vmatprep.subr.mxu0 0.0
    %296 = vmatpush1.msra.mxu0 0.0
    %297 = vmatprep.mubr.f32.mxu0 0.0
    %298 = vmatmul.mubr.f32.gmra.mrb[0].mxu0 %v203
    %v299 = vpop.f32.mrb[0].mxu0
    %v300 = vadd.f32 %v231, %v299
    %v301 = vpop.f32.mrb[0].mxu0
    %302 = vmatprep.mubr.f32.mxu0 0.0
    %303 = vmatmul.mubr.f32.gmra.mrb[0].mxu0 %v204
    %v304 = vpop.f32.mrb[0].mxu0
    %v305 = vadd.f32 %v231, %v304
    %v306 = vpop.f32.mrb[0].mxu0
    %307 = vmatprep.mubr.f32.mxu0 0.0
    %308 = vmatmul.mubr.f32.gmra.mrb[0].mxu0 %v205
    %v309 = vpop.f32.mrb[0].mxu0
    %v310 = vadd.f32 %v231, %v309
    %v311 = vpop.f32.mrb[0].mxu0
    %312 = vmatprep.mubr.f32.mxu0 0.0
    %313 = vmatmul.mubr.f32.gmra.mrb[0].mxu0 %v206
    %v314 = vpop.f32.mrb[0].mxu0
    %v315 = vadd.f32 %v231, %v314
    %v316 = vpop.f32.mrb[0].mxu0
    %317 = vmatprep.mubr.f32.mxu0 0.0
    %318 = vmatmul.mubr.f32.gmra.mrb[0].mxu0 %v207
    %v319 = vpop.f32.mrb[0].mxu0
    %v320 = vadd.f32 %v231, %v319
    %v321 = vpop.f32.mrb[0].mxu0
    %322 = vmatprep.mubr.f32.mxu0 0.0
    %323 = vmatmul.mubr.f32.gmra.mrb[0].mxu0 %v208
    %v324 = vpop.f32.mrb[0].mxu0
    %v325 = vadd.f32 %v231, %v324
    %v326 = vpop.f32.mrb[0].mxu0
    %327 = vmatprep.mubr.f32.mxu0 0.0
    %328 = vmatmul.mubr.f32.gmra.mrb[0].mxu0 %v209
    %v329 = vpop.f32.mrb[0].mxu0
    %v330 = vadd.f32 %v231, %v329
    %v331 = vpop.f32.mrb[0].mxu0
    %332 = vdwg.mxu0
    %333 = vst [vmem:[#allocation10] sm:$0xff] %v300
    %334 = vst [vmem:[#allocation10 + $0x8] sm:$0xff] %v305
    %335 = vst [vmem:[#allocation10 + $0x10] sm:$0xff] %v310
    %336 = vst [vmem:[#allocation10 + $0x18] sm:$0xff] %v315
    %337 = vst [vmem:[#allocation10 + $0x20] sm:$0xff] %v320
    %338 = vst [vmem:[#allocation10 + $0x28] sm:$0xff] %v325
    %339 = vst [vmem:[#allocation10 + $0x30] sm:$0xff] %v330
    // Predicated region
    $region38: #{tpu_custom_call.1} parent=1 // pred_check
      _
    $region39: #{tpu_custom_call.1} parent=1 // pred_check_branch
      %341 = sbr.rel (0) target = $region41
    $region40: #{tpu_custom_call.1} parent=1 // pred_region
      %s343 = ssub.s32 896, 896
      %344 = vsyncadd [#allocation4], %s343
      %s345 = sshll.u32 [#allocation10], 4
      %s346 = int_to_ptr.vmem [resolvable:$true] %s345
      %351 = dma.vmem_to_hbm [thread:$0]  %s346, 896, %s5, [#allocation4], 128, 128, 8
    $region41: #{tpu_custom_call.1} parent=1 // pred_fallthru
      _
    // Predicated region
    $region42: #{tpu_custom_call.1} parent=1 // pred_check
      _
    $region43: #{tpu_custom_call.1} parent=1 // pred_check_branch
      %353 = sbr.rel (0) target = $region45
    $region44: #{tpu_custom_call.1} parent=1 // pred_region
      %354 = dma.done [#allocation4], 896
    $region45: #{tpu_custom_call.1} parent=1 // pred_fallthru
      _
    %355 = vsyncpa [#allocation3], 1
    %356 = vsyncpa [#allocation8], 1
    %357 = vsyncpa [#allocation4], 1
    %358 = vsyncpa [#allocation5], 1

</llo_original>
